<compile_context>
chip_gen: v7x
topology: tpu7x:2x2x1
jax: 0.10.0
libtpu: 0.0.40
codegen_flags: <defaults>
</compile_context>

<pallas_src>
import functools
import numpy as np
import jax
import jax.numpy as jnp
from jax.experimental import pallas as pl
from jax.experimental.pallas import tpu as pltpu


def _round_up(n, m):
    return ((n + m - 1) // m) * m


def make_discriminator_params(key, input_dim, discriminator_dim, pac=10):
    """Deterministic parameter init (matches PyTorch Linear shapes)."""
    dims = [input_dim * pac] + list(discriminator_dim) + [1]
    params = []
    for din, dout in zip(dims[:-1], dims[1:]):
        key, kw, kb = jax.random.split(key, 3)
        bound = 1.0 / np.sqrt(din)
        w = jax.random.uniform(kw, (din, dout), jnp.float32, -bound, bound)
        b = jax.random.uniform(kb, (1, dout), jnp.float32, -bound, bound)
        params.append((w, b))
    return params


def _pad_feature_dims(feat_dims):
    """128-lane padding; 256-lane for wide dims on chips with a 256x256 MXU."""
    try:
        kind = jax.devices()[0].device_kind.lower()
    except Exception:
        kind = ""
    big_mxu = "v5" not in kind  # v6e / v7x: 2x 256x256 MXU; v5e: 4x 128x128
    return [_round_up(d, 256 if (big_mxu and d >= 256) else 128) for d in feat_dims]


def prepare_discriminator_params(params, input_dim, pac=10):
    """One-time padding + bf16 cast of weights.  Cache and reuse the result."""
    pacdim = input_dim * pac
    feat_dims = [pacdim] + [w.shape[1] for (w, _) in params]
    feat_pad = _pad_feature_dims(feat_dims)
    padded = []
    for li, (w, b) in enumerate(params):
        din, dout = w.shape
        din_p, dout_p = feat_pad[li], feat_pad[li + 1]
        wp = jnp.zeros((din_p, dout_p), jnp.bfloat16)
        wp = wp.at[:din, :dout].set(w.astype(jnp.bfloat16))
        bp = jnp.zeros((1, dout_p), jnp.float32)
        bp = bp.at[:, :dout].set(b.reshape(1, -1))
        padded.append((wp, bp))
    return {"weights": padded, "feat_pad": feat_pad, "pacdim": pacdim, "pac": pac}


def _disc_kernel(n_layers, x_ref, *refs):
    """Full MLP for one row tile; refs = (w0,b0, w1,b1, ..., out_ref).

    bf16 operands into the MXU, f32 accumulation and bias/LeakyReLU epilogue.
    """
    o_ref = refs[-1]
    h = x_ref[...]                                   # bf16
    for li in range(n_layers):
        w = refs[2 * li][...]                        # bf16
        b = refs[2 * li + 1][...]                    # f32
        acc = jnp.dot(h, w, preferred_element_type=jnp.float32) + b
        if li < n_layers - 1:
            # LeakyReLU(0.2) in f32; Dropout(0.5) is identity in eval mode.
            acc = jnp.where(acc > 0, acc, 0.2 * acc)
            h = acc.astype(jnp.bfloat16)
        else:
            h = acc
    o_ref[...] = h.astype(o_ref.dtype)


def discriminator_forward(x, prep):
    pac, pacdim = prep["pac"], prep["pacdim"]
    feat_pad, weights = prep["feat_pad"], prep["weights"]
    n_layers = len(weights)

    B, input_dim = x.shape
    assert B % pac == 0, "batch must be divisible by pac"
    rows = B // pac
    assert input_dim * pac == pacdim
    xr = x.reshape(rows, pacdim)

    # Row tiling: tiny batches -> single step at 16-row granularity;
    # mid batches -> 128-row tiles (>= 2 steps for megacore);
    # large batches -> 256-row tiles (fills 256x256 MXU on v6e/v7x).
    if rows <= 128:
        ROW_TILE = _round_up(max(rows, 8), 16)
        rows_pad = ROW_TILE
    elif rows <= 512:
        ROW_TILE = 128
        rows_pad = _round_up(rows, ROW_TILE)
    else:
        ROW_TILE = 256
        rows_pad = _round_up(rows, ROW_TILE)

    # Zero-padded, bf16 packed input (rows_pad, feat_pad[0]).
    xp = jnp.zeros((rows_pad, feat_pad[0]), jnp.bfloat16)
    xp = xp.at[:rows, :pacdim].set(xr.astype(jnp.bfloat16))

    out_pad = feat_pad[-1]          # lane-dense bf16 slab; real result in col 0
    flat_weights = [t for pair in weights for t in pair]

    # Cost estimate + VMEM budget from the actual padded tensors.
    w_bytes = int(sum(w.size * 2 + b.size * 4 for (w, b) in weights))
    in_bytes = rows_pad * feat_pad[0] * 2
    out_bytes = rows_pad * out_pad * 2
    flops = 2 * rows_pad * sum(feat_pad[i] * feat_pad[i + 1] for i in range(n_layers))
    cost = pl.CostEstimate(flops=flops, transcendentals=0,
                           bytes_accessed=in_bytes + w_bytes + out_bytes)
    tile_bytes = ROW_TILE * feat_pad[0] * 2 + ROW_TILE * out_pad * 2
    vmem_needed = 2 * tile_bytes + 2 * w_bytes + (4 << 20)
    vmem_limit = int(min(max(vmem_needed, 32 << 20), 64 << 20))
    # TODO(synk): if resident padded weights ever approach ~32 MiB (huge
    # one-hot pacdim), K-tile layer 0 over din with an f32 VMEM accumulator.

    def _run(single_buffer_weights):
        wkw = {"pipeline_mode": pl.Buffered(1)} if single_buffer_weights else {}
        in_specs = [pl.BlockSpec((ROW_TILE, feat_pad[0]), lambda i: (i, 0))]
        for li in range(n_layers):
            din_p, dout_p = feat_pad[li], feat_pad[li + 1]
            in_specs += [pl.BlockSpec((din_p, dout_p), lambda i: (0, 0), **wkw),
                         pl.BlockSpec((1, dout_p), lambda i: (0, 0), **wkw)]
        return pl.pallas_call(
            functools.partial(_disc_kernel, n_layers),
            out_shape=jax.ShapeDtypeStruct((rows_pad, out_pad), jnp.bfloat16),
            grid=(rows_pad // ROW_TILE,),
            in_specs=in_specs,
            out_specs=pl.BlockSpec((ROW_TILE, out_pad), lambda i: (i, 0)),
            compiler_params=pltpu.CompilerParams(
                dimension_semantics=("parallel",),
                vmem_limit_bytes=vmem_limit),
            cost_estimate=cost,
        )(xp, *flat_weights)

    try:
        # Constant-index weights single-buffered: halves resident weight VMEM.
        out = _run(True)
    except Exception:
        # Fall back to default double-buffering if Buffered(1) is rejected.
        out = _run(False)

    return out[:rows, :1].astype(jnp.float32)


def discriminator_ref(x, params, pac=10):
    """Pure-JAX reference with the same bf16-matmul / f32-accumulate math."""
    rows = x.shape[0] // pac
    h = x.reshape(rows, -1).astype(jnp.bfloat16)
    for li, (w, b) in enumerate(params):
        acc = jnp.dot(h, w.astype(jnp.bfloat16),
                      preferred_element_type=jnp.float32) + b
        if li < len(params) - 1:
            acc = jnp.where(acc > 0, acc, 0.2 * acc)
            h = acc.astype(jnp.bfloat16)
        else:
            h = acc
    return h


if __name__ == "__main__":
    key = jax.random.PRNGKey(0)
    input_dim = 16
    discriminator_dim = (32, 32)
    pac = 10
    batch = 40  # 4 "packed" rows after view(-1, input_dim * pac)

    kx, kp = jax.random.split(key)
    x = jax.random.normal(kx, (batch, input_dim), dtype=jnp.float32)
    params = make_discriminator_params(kp, input_dim, discriminator_dim, pac)

    # One-time padded/bf16 parameter prep (cache and reuse across calls).
    prep = prepare_discriminator_params(params, input_dim, pac=pac)

    out = discriminator_forward(x, prep)
    out = jax.block_until_ready(out)

    ref = discriminator_ref(x, params, pac=pac)
    # Kernel output passes through a bf16 slab -> allow ~1% tolerance.
    np.testing.assert_allclose(np.asarray(out), np.asarray(ref),
                               rtol=1e-2, atol=1e-2)
    assert out.shape == (batch // pac, 1)
    print("KERNEL_OK")
</pallas_src>

<mosaic_0001>
module attributes {stable_mosaic.version = 11 : i64} {
  func.func @_disc_kernel(%arg0: i32, %arg1: memref<16x256xbf16, #tpu.memory_space<vmem>>, %arg2: memref<256x128xbf16, #tpu.memory_space<vmem>>, %arg3: memref<1x128xf32, #tpu.memory_space<vmem>>, %arg4: memref<128x128xbf16, #tpu.memory_space<vmem>>, %arg5: memref<1x128xf32, #tpu.memory_space<vmem>>, %arg6: memref<128x128xbf16, #tpu.memory_space<vmem>>, %arg7: memref<1x128xf32, #tpu.memory_space<vmem>>, %arg8: memref<16x128xbf16, #tpu.memory_space<vmem>>) attributes {dimension_semantics = [#tpu.dimension_semantics<parallel>], iteration_bounds = array<i64: 1>, scalar_prefetch = 0 : i64, scratch_operands = 0 : i64, tpu.core_type = #tpu.core_type<tc>, window_params = [{transform_indices = @transform_0, window_bounds = array<i64: 16, 256>}, {pipeline_mode = #tpu.pipeline_mode<synchronous>, transform_indices = @transform_1, window_bounds = array<i64: 256, 128>}, {pipeline_mode = #tpu.pipeline_mode<synchronous>, transform_indices = @transform_2, window_bounds = array<i64: 1, 128>}, {pipeline_mode = #tpu.pipeline_mode<synchronous>, transform_indices = @transform_3, window_bounds = array<i64: 128, 128>}, {pipeline_mode = #tpu.pipeline_mode<synchronous>, transform_indices = @transform_4, window_bounds = array<i64: 1, 128>}, {pipeline_mode = #tpu.pipeline_mode<synchronous>, transform_indices = @transform_5, window_bounds = array<i64: 128, 128>}, {pipeline_mode = #tpu.pipeline_mode<synchronous>, transform_indices = @transform_6, window_bounds = array<i64: 1, 128>}, {transform_indices = @transform_7, window_bounds = array<i64: 16, 128>}]} {
    %c0 = arith.constant 0 : index
    %c0_0 = arith.constant 0 : index
    %0 = vector.load %arg1[%c0, %c0_0] : memref<16x256xbf16, #tpu.memory_space<vmem>>, vector<16x256xbf16>
    %c0_1 = arith.constant 0 : index
    %c0_2 = arith.constant 0 : index
    %1 = vector.load %arg2[%c0_1, %c0_2] : memref<256x128xbf16, #tpu.memory_space<vmem>>, vector<256x128xbf16>
    %c0_3 = arith.constant 0 : index
    %c0_4 = arith.constant 0 : index
    %2 = vector.load %arg3[%c0_3, %c0_4] : memref<1x128xf32, #tpu.memory_space<vmem>>, vector<1x128xf32>
    %cst = arith.constant dense<0.000000e+00> : vector<16x128xf32>
    %3 = tpu.matmul %0, %1, %cst {dimension_numbers = #tpu.dot_dimension_numbers<[1], [0], [0], [1], [0, 0, 1, 1], [], []>} : vector<16x256xbf16>, vector<256x128xbf16>, vector<16x128xf32> -> vector<16x128xf32>
    %4 = vector.broadcast %2 : vector<1x128xf32> to vector<16x128xf32>
    %5 = arith.addf %3, %4 : vector<16x128xf32>
    %cst_5 = arith.constant 0.000000e+00 : f32
    %6 = vector.broadcast %cst_5 : f32 to vector<16x128xf32>
    %7 = arith.cmpf ogt, %5, %6 : vector<16x128xf32>
    %cst_6 = arith.constant 2.000000e-01 : f32
    %8 = vector.broadcast %cst_6 : f32 to vector<16x128xf32>
    %9 = arith.mulf %8, %5 : vector<16x128xf32>
    %10 = arith.select %7, %5, %9 : vector<16x128xi1>, vector<16x128xf32>
    %11 = arith.truncf %10 : vector<16x128xf32> to vector<16x128xbf16>
    %c0_7 = arith.constant 0 : index
    %c0_8 = arith.constant 0 : index
    %12 = vector.load %arg4[%c0_7, %c0_8] : memref<128x128xbf16, #tpu.memory_space<vmem>>, vector<128x128xbf16>
    %c0_9 = arith.constant 0 : index
    %c0_10 = arith.constant 0 : index
    %13 = vector.load %arg5[%c0_9, %c0_10] : memref<1x128xf32, #tpu.memory_space<vmem>>, vector<1x128xf32>
    %cst_11 = arith.constant dense<0.000000e+00> : vector<16x128xf32>
    %14 = tpu.matmul %11, %12, %cst_11 {dimension_numbers = #tpu.dot_dimension_numbers<[1], [0], [0], [1], [0, 0, 1, 1], [], []>} : vector<16x128xbf16>, vector<128x128xbf16>, vector<16x128xf32> -> vector<16x128xf32>
    %15 = vector.broadcast %13 : vector<1x128xf32> to vector<16x128xf32>
    %16 = arith.addf %14, %15 : vector<16x128xf32>
    %cst_12 = arith.constant 0.000000e+00 : f32
    %17 = vector.broadcast %cst_12 : f32 to vector<16x128xf32>
    %18 = arith.cmpf ogt, %16, %17 : vector<16x128xf32>
    %cst_13 = arith.constant 2.000000e-01 : f32
    %19 = vector.broadcast %cst_13 : f32 to vector<16x128xf32>
    %20 = arith.mulf %19, %16 : vector<16x128xf32>
    %21 = arith.select %18, %16, %20 : vector<16x128xi1>, vector<16x128xf32>
    %22 = arith.truncf %21 : vector<16x128xf32> to vector<16x128xbf16>
    %c0_14 = arith.constant 0 : index
    %c0_15 = arith.constant 0 : index
    %23 = vector.load %arg6[%c0_14, %c0_15] : memref<128x128xbf16, #tpu.memory_space<vmem>>, vector<128x128xbf16>
    %c0_16 = arith.constant 0 : index
    %c0_17 = arith.constant 0 : index
    %24 = vector.load %arg7[%c0_16, %c0_17] : memref<1x128xf32, #tpu.memory_space<vmem>>, vector<1x128xf32>
    %cst_18 = arith.constant dense<0.000000e+00> : vector<16x128xf32>
    %25 = tpu.matmul %22, %23, %cst_18 {dimension_numbers = #tpu.dot_dimension_numbers<[1], [0], [0], [1], [0, 0, 1, 1], [], []>} : vector<16x128xbf16>, vector<128x128xbf16>, vector<16x128xf32> -> vector<16x128xf32>
    %26 = vector.broadcast %24 : vector<1x128xf32> to vector<16x128xf32>
    %27 = arith.addf %25, %26 : vector<16x128xf32>
    %28 = arith.truncf %27 : vector<16x128xf32> to vector<16x128xbf16>
    %c0_19 = arith.constant 0 : index
    %c0_20 = arith.constant 0 : index
    %29 = vector.load %arg8[%c0_19, %c0_20] : memref<16x128xbf16, #tpu.memory_space<vmem>>, vector<16x128xbf16>
    tpu.vector_store %arg8[%c0_19, %c0_20], %28 {strides = array<i32>} : memref<16x128xbf16, #tpu.memory_space<vmem>>, vector<16x128xbf16>,
    return
  }
  func.func @transform_0(%arg0: i32) -> (i32, i32) {
    %c0_i32 = arith.constant 0 : i32
    %c0_i32_0 = arith.constant 0 : i32
    return %arg0, %c0_i32 : i32, i32
  }
  func.func @transform_1(%arg0: i32) -> (i32, i32) {
    %c0_i32 = arith.constant 0 : i32
    %c0_i32_0 = arith.constant 0 : i32
    %c0_i32_1 = arith.constant 0 : i32
    return %c0_i32, %c0_i32_0 : i32, i32
  }
  func.func @transform_2(%arg0: i32) -> (i32, i32) {
    %c0_i32 = arith.constant 0 : i32
    %c0_i32_0 = arith.constant 0 : i32
    %c0_i32_1 = arith.constant 0 : i32
    return %c0_i32, %c0_i32_0 : i32, i32
  }
  func.func @transform_3(%arg0: i32) -> (i32, i32) {
    %c0_i32 = arith.constant 0 : i32
    %c0_i32_0 = arith.constant 0 : i32
    %c0_i32_1 = arith.constant 0 : i32
    return %c0_i32, %c0_i32_0 : i32, i32
  }
  func.func @transform_4(%arg0: i32) -> (i32, i32) {
    %c0_i32 = arith.constant 0 : i32
    %c0_i32_0 = arith.constant 0 : i32
    %c0_i32_1 = arith.constant 0 : i32
    return %c0_i32, %c0_i32_0 : i32, i32
  }
  func.func @transform_5(%arg0: i32) -> (i32, i32) {
    %c0_i32 = arith.constant 0 : i32
    %c0_i32_0 = arith.constant 0 : i32
    %c0_i32_1 = arith.constant 0 : i32
    return %c0_i32, %c0_i32_0 : i32, i32
  }
  func.func @transform_6(%arg0: i32) -> (i32, i32) {
    %c0_i32 = arith.constant 0 : i32
    %c0_i32_0 = arith.constant 0 : i32
    %c0_i32_1 = arith.constant 0 : i32
    return %c0_i32, %c0_i32_0 : i32, i32
  }
  func.func @transform_7(%arg0: i32) -> (i32, i32) {
    %c0_i32 = arith.constant 0 : i32
    %c0_i32_0 = arith.constant 0 : i32
    return %arg0, %c0_i32 : i32, i32
  }
}

module attributes {stable_mosaic.version = 11 : i64} {
  func.func @_disc_kernel(%arg0: i32, %arg1: memref<16x256xbf16, #tpu.memory_space<vmem>>, %arg2: memref<256x128xbf16, #tpu.memory_space<vmem>>, %arg3: memref<1x128xf32, #tpu.memory_space<vmem>>, %arg4: memref<128x128xbf16, #tpu.memory_space<vmem>>, %arg5: memref<1x128xf32, #tpu.memory_space<vmem>>, %arg6: memref<128x128xbf16, #tpu.memory_space<vmem>>, %arg7: memref<1x128xf32, #tpu.memory_space<vmem>>, %arg8: memref<16x128xbf16, #tpu.memory_space<vmem>>) attributes {dimension_semantics = [#tpu.dimension_semantics<parallel>], iteration_bounds = array<i64: 1>, scalar_prefetch = 0 : i64, scratch_operands = 0 : i64, tpu.core_type = #tpu.core_type<tc>, window_params = [{transform_indices = @transform_0, window_bounds = array<i64: 16, 256>}, {pipeline_mode = #tpu.pipeline_mode<synchronous>, transform_indices = @transform_1, window_bounds = array<i64: 256, 128>}, {pipeline_mode = #tpu.pipeline_mode<synchronous>, transform_indices = @transform_2, window_bounds = array<i64: 1, 128>}, {pipeline_mode = #tpu.pipeline_mode<synchronous>, transform_indices = @transform_3, window_bounds = array<i64: 128, 128>}, {pipeline_mode = #tpu.pipeline_mode<synchronous>, transform_indices = @transform_4, window_bounds = array<i64: 1, 128>}, {pipeline_mode = #tpu.pipeline_mode<synchronous>, transform_indices = @transform_5, window_bounds = array<i64: 128, 128>}, {pipeline_mode = #tpu.pipeline_mode<synchronous>, transform_indices = @transform_6, window_bounds = array<i64: 1, 128>}, {transform_indices = @transform_7, window_bounds = array<i64: 16, 128>}]} {
    %c0 = arith.constant 0 : index
    %c0_0 = arith.constant 0 : index
    %0 = vector.load %arg1[%c0, %c0_0] : memref<16x256xbf16, #tpu.memory_space<vmem>>, vector<16x256xbf16>
    %c0_1 = arith.constant 0 : index
    %c0_2 = arith.constant 0 : index
    %1 = vector.load %arg2[%c0_1, %c0_2] : memref<256x128xbf16, #tpu.memory_space<vmem>>, vector<256x128xbf16>
    %c0_3 = arith.constant 0 : index
    %c0_4 = arith.constant 0 : index
    %2 = vector.load %arg3[%c0_3, %c0_4] : memref<1x128xf32, #tpu.memory_space<vmem>>, vector<1x128xf32>
    %cst = arith.constant dense<0.000000e+00> : vector<16x128xf32>
    %3 = tpu.matmul %0, %1, %cst {dimension_numbers = #tpu.dot_dimension_numbers<[1], [0], [0], [1], [0, 0, 1, 1], [], []>} : vector<16x256xbf16>, vector<256x128xbf16>, vector<16x128xf32> -> vector<16x128xf32>
    %4 = vector.broadcast %2 : vector<1x128xf32> to vector<16x128xf32>
    %5 = arith.addf %3, %4 : vector<16x128xf32>
    %cst_5 = arith.constant 0.000000e+00 : f32
    %6 = vector.broadcast %cst_5 : f32 to vector<16x128xf32>
    %7 = arith.cmpf ogt, %5, %6 : vector<16x128xf32>
    %cst_6 = arith.constant 2.000000e-01 : f32
    %8 = vector.broadcast %cst_6 : f32 to vector<16x128xf32>
    %9 = arith.mulf %8, %5 : vector<16x128xf32>
    %10 = arith.select %7, %5, %9 : vector<16x128xi1>, vector<16x128xf32>
    %11 = arith.truncf %10 : vector<16x128xf32> to vector<16x128xbf16>
    %c0_7 = arith.constant 0 : index
    %c0_8 = arith.constant 0 : index
    %12 = vector.load %arg4[%c0_7, %c0_8] : memref<128x128xbf16, #tpu.memory_space<vmem>>, vector<128x128xbf16>
    %c0_9 = arith.constant 0 : index
    %c0_10 = arith.constant 0 : index
    %13 = vector.load %arg5[%c0_9, %c0_10] : memref<1x128xf32, #tpu.memory_space<vmem>>, vector<1x128xf32>
    %cst_11 = arith.constant dense<0.000000e+00> : vector<16x128xf32>
    %14 = tpu.matmul %11, %12, %cst_11 {dimension_numbers = #tpu.dot_dimension_numbers<[1], [0], [0], [1], [0, 0, 1, 1], [], []>} : vector<16x128xbf16>, vector<128x128xbf16>, vector<16x128xf32> -> vector<16x128xf32>
    %15 = vector.broadcast %13 : vector<1x128xf32> to vector<16x128xf32>
    %16 = arith.addf %14, %15 : vector<16x128xf32>
    %cst_12 = arith.constant 0.000000e+00 : f32
    %17 = vector.broadcast %cst_12 : f32 to vector<16x128xf32>
    %18 = arith.cmpf ogt, %16, %17 : vector<16x128xf32>
    %cst_13 = arith.constant 2.000000e-01 : f32
    %19 = vector.broadcast %cst_13 : f32 to vector<16x128xf32>
    %20 = arith.mulf %19, %16 : vector<16x128xf32>
    %21 = arith.select %18, %16, %20 : vector<16x128xi1>, vector<16x128xf32>
    %22 = arith.truncf %21 : vector<16x128xf32> to vector<16x128xbf16>
    %c0_14 = arith.constant 0 : index
    %c0_15 = arith.constant 0 : index
    %23 = vector.load %arg6[%c0_14, %c0_15] : memref<128x128xbf16, #tpu.memory_space<vmem>>, vector<128x128xbf16>
    %c0_16 = arith.constant 0 : index
    %c0_17 = arith.constant 0 : index
    %24 = vector.load %arg7[%c0_16, %c0_17] : memref<1x128xf32, #tpu.memory_space<vmem>>, vector<1x128xf32>
    %cst_18 = arith.constant dense<0.000000e+00> : vector<16x128xf32>
    %25 = tpu.matmul %22, %23, %cst_18 {dimension_numbers = #tpu.dot_dimension_numbers<[1], [0], [0], [1], [0, 0, 1, 1], [], []>} : vector<16x128xbf16>, vector<128x128xbf16>, vector<16x128xf32> -> vector<16x128xf32>
    %26 = vector.broadcast %24 : vector<1x128xf32> to vector<16x128xf32>
    %27 = arith.addf %25, %26 : vector<16x128xf32>
    %28 = arith.truncf %27 : vector<16x128xf32> to vector<16x128xbf16>
    %c0_19 = arith.constant 0 : index
    %c0_20 = arith.constant 0 : index
    %29 = vector.load %arg8[%c0_19, %c0_20] : memref<16x128xbf16, #tpu.memory_space<vmem>>, vector<16x128xbf16>
    tpu.vector_store %arg8[%c0_19, %c0_20], %28 {strides = array<i32>} : memref<16x128xbf16, #tpu.memory_space<vmem>>, vector<16x128xbf16>,
    return
  }
  func.func @transform_0(%arg0: i32) -> (i32, i32) {
    %c0_i32 = arith.constant 0 : i32
    %c0_i32_0 = arith.constant 0 : i32
    return %arg0, %c0_i32 : i32, i32
  }
  func.func @transform_1(%arg0: i32) -> (i32, i32) {
    %c0_i32 = arith.constant 0 : i32
    %c0_i32_0 = arith.constant 0 : i32
    %c0_i32_1 = arith.constant 0 : i32
    return %c0_i32, %c0_i32_0 : i32, i32
  }
  func.func @transform_2(%arg0: i32) -> (i32, i32) {
    %c0_i32 = arith.constant 0 : i32
    %c0_i32_0 = arith.constant 0 : i32
    %c0_i32_1 = arith.constant 0 : i32
    return %c0_i32, %c0_i32_0 : i32, i32
  }
  func.func @transform_3(%arg0: i32) -> (i32, i32) {
    %c0_i32 = arith.constant 0 : i32
    %c0_i32_0 = arith.constant 0 : i32
    %c0_i32_1 = arith.constant 0 : i32
    return %c0_i32, %c0_i32_0 : i32, i32
  }
  func.func @transform_4(%arg0: i32) -> (i32, i32) {
    %c0_i32 = arith.constant 0 : i32
    %c0_i32_0 = arith.constant 0 : i32
    %c0_i32_1 = arith.constant 0 : i32
    return %c0_i32, %c0_i32_0 : i32, i32
  }
  func.func @transform_5(%arg0: i32) -> (i32, i32) {
    %c0_i32 = arith.constant 0 : i32
    %c0_i32_0 = arith.constant 0 : i32
    %c0_i32_1 = arith.constant 0 : i32
    return %c0_i32, %c0_i32_0 : i32, i32
  }
  func.func @transform_6(%arg0: i32) -> (i32, i32) {
    %c0_i32 = arith.constant 0 : i32
    %c0_i32_0 = arith.constant 0 : i32
    %c0_i32_1 = arith.constant 0 : i32
    return %c0_i32, %c0_i32_0 : i32, i32
  }
  func.func @transform_7(%arg0: i32) -> (i32, i32) {
    %c0_i32 = arith.constant 0 : i32
    %c0_i32_0 = arith.constant 0 : i32
    return %arg0, %c0_i32 : i32, i32
  }
}

</mosaic_0001>

<llo_original>
// kernel: tpu_custom_call.1
$region0: #{tpu_custom_call.1}
  #allocation0 [shape = 'u32[]', space=smem, size = 0x4, offset = 0x4, fixed_abs, tag = 'smem constant byte address 0x4 - core index']
  #allocation1 [shape = 'u32[144,128]{1,0:T(1,128)}', space=vmem, size = 0x12000, scoped, tag = 'internal scratch']
  %s0 = inlined_call_operand.hbm [shape: bf16[16,256], index: 0, kind: input, shape index: {}]
  %s1 = inlined_call_operand.hbm [shape: bf16[256,128], index: 1, kind: input, shape index: {}]
  %s2 = inlined_call_operand.vmem [shape: f32[1,128], index: 2, kind: input, shape index: {}]
  %s3 = inlined_call_operand.hbm [shape: bf16[128,128], index: 3, kind: input, shape index: {}]
  %s4 = inlined_call_operand.vmem [shape: f32[1,128], index: 4, kind: input, shape index: {}]
  %s5 = inlined_call_operand.hbm [shape: bf16[128,128], index: 5, kind: input, shape index: {}]
  %s6 = inlined_call_operand.vmem [shape: f32[1,128], index: 6, kind: input, shape index: {}]
  %s7 = inlined_call_operand.hbm [shape: bf16[16,128], index: 7, kind: output, shape index: {}]
  %s8 = sld [smem:[#allocation0]]
  $region54: #{tpu_custom_call.1} parent=0
    _
  %s10 = ssub.s32 1, %s8
  %s11 = scalar_select 0, %s10, %s8
  $region1: #{tpu_custom_call.1} parent=0
    #allocation2 [shape = 'u8[8192]{0}', space=vmem, size = 0x2000, scoped, tag = 'input window, operand 0, single buffered']
    #allocation3 [shape = 's32[1]{0}', space=sflag, size = 0x4, scoped, tag = 'scoped memory for tpu_custom_call.1']
    #allocation4 [shape = 's32[1]{0}', space=sflag, size = 0x4, scoped, tag = 'scoped memory for tpu_custom_call.1']
    #allocation5 [shape = 'u8[65536]{0}', space=vmem, size = 0x10000, scoped, tag = 'input window, operand 1, single buffered']
    #allocation6 [shape = 's32[1]{0}', space=sflag, size = 0x4, scoped, tag = 'scoped memory for tpu_custom_call.1']
    #allocation7 [shape = 'u8[32768]{0}', space=vmem, size = 0x8000, scoped, tag = 'input window, operand 3, single buffered']
    #allocation8 [shape = 'u8[32768]{0}', space=vmem, size = 0x8000, scoped, tag = 'input window, operand 5, single buffered']
    #allocation9 [shape = 's32[1]{0}', space=sflag, size = 0x4, scoped, tag = 'scoped memory for tpu_custom_call.1']
    #allocation10 [shape = 'u8[4096]{0}', space=vmem, size = 0x1000, scoped, tag = 'output window, operand 0, single buffered']
    %12 = vsyncpa [#allocation3], 0
    %13 = vsyncpa [#allocation6], 0
    %14 = vsyncpa [#allocation9], 0
    %15 = vsyncpa [#allocation4], 0
    // Predicated region
    $region2: #{tpu_custom_call.1} parent=1 // pred_check
      _
    $region3: #{tpu_custom_call.1} parent=1 // pred_check_branch
      %17 = sbr.rel (0) target = $region5
    $region4: #{tpu_custom_call.1} parent=1 // pred_region
      %s19 = ssub.s32 256, 256
      %20 = vsyncadd [#allocation3], %s19
      %s21 = sshll.u32 [#allocation2], 4
      %s22 = int_to_ptr.vmem [resolvable:$true] %s21
      %27 = dma.hbm_to_vmem [thread:$0]  %s0, 256, %s22, [#allocation3], 128, 128, 8
    $region5: #{tpu_custom_call.1} parent=1 // pred_fallthru
      _
    // Predicated region
    $region6: #{tpu_custom_call.1} parent=1 // pred_check
      _
    $region7: #{tpu_custom_call.1} parent=1 // pred_check_branch
      %29 = sbr.rel (0) target = $region9
    $region8: #{tpu_custom_call.1} parent=1 // pred_region
      %s31 = ssub.s32 2048, 2048
      %32 = vsyncadd [#allocation6], %s31
      %s33 = sshll.u32 [#allocation5], 4
      %s34 = int_to_ptr.vmem [resolvable:$true] %s33
      %39 = dma.hbm_to_vmem [thread:$0]  %s1, 2048, %s34, [#allocation6], 64, 64, 4
    $region9: #{tpu_custom_call.1} parent=1 // pred_fallthru
      _
    // Predicated region
    $region10: #{tpu_custom_call.1} parent=1 // pred_check
      _
    $region11: #{tpu_custom_call.1} parent=1 // pred_check_branch
      %41 = sbr.rel (0) target = $region13
    $region12: #{tpu_custom_call.1} parent=1 // pred_region
      _
    $region13: #{tpu_custom_call.1} parent=1 // pred_fallthru
      _
    // Predicated region
    $region14: #{tpu_custom_call.1} parent=1 // pred_check
      _
    $region15: #{tpu_custom_call.1} parent=1 // pred_check_branch
      %43 = sbr.rel (0) target = $region17
    $region16: #{tpu_custom_call.1} parent=1 // pred_region
      %s45 = ssub.s32 1024, 1024
      %46 = vsyncadd [#allocation6], %s45
      %s47 = sshll.u32 [#allocation7], 4
      %s48 = int_to_ptr.vmem [resolvable:$true] %s47
      %53 = dma.hbm_to_vmem [thread:$0]  %s3, 1024, %s48, [#allocation6], 64, 64, 4
    $region17: #{tpu_custom_call.1} parent=1 // pred_fallthru
      _
    // Predicated region
    $region18: #{tpu_custom_call.1} parent=1 // pred_check
      _
    $region19: #{tpu_custom_call.1} parent=1 // pred_check_branch
      %55 = sbr.rel (0) target = $region21
    $region20: #{tpu_custom_call.1} parent=1 // pred_region
      _
    $region21: #{tpu_custom_call.1} parent=1 // pred_fallthru
      _
    // Predicated region
    $region22: #{tpu_custom_call.1} parent=1 // pred_check
      _
    $region23: #{tpu_custom_call.1} parent=1 // pred_check_branch
      %57 = sbr.rel (0) target = $region25
    $region24: #{tpu_custom_call.1} parent=1 // pred_region
      %s59 = ssub.s32 1024, 1024
      %60 = vsyncadd [#allocation9], %s59
      %s61 = sshll.u32 [#allocation8], 4
      %s62 = int_to_ptr.vmem [resolvable:$true] %s61
      %67 = dma.hbm_to_vmem [thread:$0]  %s5, 1024, %s62, [#allocation9], 64, 64, 4
    $region25: #{tpu_custom_call.1} parent=1 // pred_fallthru
      _
    // Predicated region
    $region26: #{tpu_custom_call.1} parent=1 // pred_check
      _
    $region27: #{tpu_custom_call.1} parent=1 // pred_check_branch
      %69 = sbr.rel (0) target = $region29
    $region28: #{tpu_custom_call.1} parent=1 // pred_region
      _
    $region29: #{tpu_custom_call.1} parent=1 // pred_fallthru
      _
    // Predicated region
    $region30: #{tpu_custom_call.1} parent=1 // pred_check
      _
    $region31: #{tpu_custom_call.1} parent=1 // pred_check_branch
      %71 = sbr.rel (0) target = $region33
    $region32: #{tpu_custom_call.1} parent=1 // pred_region
      %72 = dma.done [#allocation3], 256
    $region33: #{tpu_custom_call.1} parent=1 // pred_fallthru
      _
    // Predicated region
    $region34: #{tpu_custom_call.1} parent=1 // pred_check
      _
    $region35: #{tpu_custom_call.1} parent=1 // pred_check_branch
      %74 = sbr.rel (0) target = $region37
    $region36: #{tpu_custom_call.1} parent=1 // pred_region
      %75 = dma.done [#allocation6], 2048
    $region37: #{tpu_custom_call.1} parent=1 // pred_fallthru
      _
    // Predicated region
    $region38: #{tpu_custom_call.1} parent=1 // pred_check
      _
    $region39: #{tpu_custom_call.1} parent=1 // pred_check_branch
      %77 = sbr.rel (0) target = $region41
    $region40: #{tpu_custom_call.1} parent=1 // pred_region
      %78 = dma.done [#allocation6], 1024
    $region41: #{tpu_custom_call.1} parent=1 // pred_fallthru
      _
    // Predicated region
    $region42: #{tpu_custom_call.1} parent=1 // pred_check
      _
    $region43: #{tpu_custom_call.1} parent=1 // pred_check_branch
      %80 = sbr.rel (0) target = $region45
    $region44: #{tpu_custom_call.1} parent=1 // pred_region
      %81 = dma.done [#allocation9], 1024
    $region45: #{tpu_custom_call.1} parent=1 // pred_fallthru
      _
    %v83 = vld [vmem:[#allocation2] sm:$0xff]
    %v84 = vld [vmem:[#allocation2 + $0x8] sm:$0xff]
    %v85 = vld [vmem:[#allocation5] sm:$0xf]
    %v86 = vld [vmem:[#allocation5 + $0x4] sm:$0xf]
    %v87 = vld [vmem:[#allocation5 + $0x8] sm:$0xf]
    %v88 = vld [vmem:[#allocation5 + $0xc] sm:$0xf]
    %v89 = vld [vmem:[#allocation5 + $0x10] sm:$0xf]
    %v90 = vld [vmem:[#allocation5 + $0x14] sm:$0xf]
    %v91 = vld [vmem:[#allocation5 + $0x18] sm:$0xf]
    %v92 = vld [vmem:[#allocation5 + $0x1c] sm:$0xf]
    %v93 = vld [vmem:[#allocation5 + $0x20] sm:$0xf]
    %v94 = vld [vmem:[#allocation5 + $0x24] sm:$0xf]
    %v95 = vld [vmem:[#allocation5 + $0x28] sm:$0xf]
    %v96 = vld [vmem:[#allocation5 + $0x2c] sm:$0xf]
    %v97 = vld [vmem:[#allocation5 + $0x30] sm:$0xf]
    %v98 = vld [vmem:[#allocation5 + $0x34] sm:$0xf]
    %v99 = vld [vmem:[#allocation5 + $0x38] sm:$0xf]
    %v100 = vld [vmem:[#allocation5 + $0x3c] sm:$0xf]
    %v101 = vld [vmem:[#allocation5 + $0x40] sm:$0xf]
    %v102 = vld [vmem:[#allocation5 + $0x44] sm:$0xf]
    %v103 = vld [vmem:[#allocation5 + $0x48] sm:$0xf]
    %v104 = vld [vmem:[#allocation5 + $0x4c] sm:$0xf]
    %v105 = vld [vmem:[#allocation5 + $0x50] sm:$0xf]
    %v106 = vld [vmem:[#allocation5 + $0x54] sm:$0xf]
    %v107 = vld [vmem:[#allocation5 + $0x58] sm:$0xf]
    %v108 = vld [vmem:[#allocation5 + $0x5c] sm:$0xf]
    %v109 = vld [vmem:[#allocation5 + $0x60] sm:$0xf]
    %v110 = vld [vmem:[#allocation5 + $0x64] sm:$0xf]
    %v111 = vld [vmem:[#allocation5 + $0x68] sm:$0xf]
    %v112 = vld [vmem:[#allocation5 + $0x6c] sm:$0xf]
    %v113 = vld [vmem:[#allocation5 + $0x70] sm:$0xf]
    %v114 = vld [vmem:[#allocation5 + $0x74] sm:$0xf]
    %v115 = vld [vmem:[#allocation5 + $0x78] sm:$0xf]
    %v116 = vld [vmem:[#allocation5 + $0x7c] sm:$0xf]
    %v117 = vld [vmem:[%s2] sm:$0x1]
    %v119 = vlaneseq
    %v120 = vshrl.u32 %v119, 7
    %v121 = vsub.s32 0, %v120
    %v122 = vrot.slane %v117, %v121
    %v126 = vunpack.c.l.b16 %v83
    %v127 = vunpack.c.h.b16 %v83
    %v128 = vunpack.c.l.b16 %v84
    %v129 = vunpack.c.h.b16 %v84
    %v130 = vpack.c.b16 %v128, %v126
    %v131 = vpack.c.b16 %v129, %v127
    %v166 = vunpack.c.l.b16 %v85
    %v167 = vunpack.c.l.b16 %v86
    %v168 = vunpack.c.l.b16 %v87
    %v169 = vunpack.c.l.b16 %v88
    %v170 = vunpack.c.l.b16 %v89
    %v171 = vunpack.c.l.b16 %v90
    %v172 = vunpack.c.l.b16 %v91
    %v173 = vunpack.c.l.b16 %v92
    %v174 = vunpack.c.l.b16 %v93
    %v175 = vunpack.c.l.b16 %v94
    %v176 = vunpack.c.l.b16 %v95
    %v177 = vunpack.c.l.b16 %v96
    %v178 = vunpack.c.l.b16 %v97
    %v179 = vunpack.c.l.b16 %v98
    %v180 = vunpack.c.l.b16 %v99
    %v181 = vunpack.c.l.b16 %v100
    %v182 = vunpack.c.l.b16 %v101
    %v183 = vunpack.c.l.b16 %v102
    %v184 = vunpack.c.l.b16 %v103
    %v185 = vunpack.c.l.b16 %v104
    %v186 = vunpack.c.l.b16 %v105
    %v187 = vunpack.c.l.b16 %v106
    %v188 = vunpack.c.l.b16 %v107
    %v189 = vunpack.c.l.b16 %v108
    %v190 = vunpack.c.l.b16 %v109
    %v191 = vunpack.c.l.b16 %v110
    %v192 = vunpack.c.l.b16 %v111
    %v193 = vunpack.c.l.b16 %v112
    %v194 = vunpack.c.l.b16 %v113
    %v195 = vunpack.c.l.b16 %v114
    %v196 = vunpack.c.l.b16 %v115
    %v197 = vunpack.c.l.b16 %v116
    %v198 = vpack.c.b16 %v167, %v166
    %v199 = vpack.c.b16 %v169, %v168
    %v200 = vpack.c.b16 %v171, %v170
    %v201 = vpack.c.b16 %v173, %v172
    %v202 = vpack.c.b16 %v175, %v174
    %v203 = vpack.c.b16 %v177, %v176
    %v204 = vpack.c.b16 %v179, %v178
    %v205 = vpack.c.b16 %v181, %v180
    %v206 = vpack.c.b16 %v183, %v182
    %v207 = vpack.c.b16 %v185, %v184
    %v208 = vpack.c.b16 %v187, %v186
    %v209 = vpack.c.b16 %v189, %v188
    %v210 = vpack.c.b16 %v191, %v190
    %v211 = vpack.c.b16 %v193, %v192
    %v212 = vpack.c.b16 %v195, %v194
    %v213 = vpack.c.b16 %v197, %v196
    %230 = vmatprep.subr.bf16.mxu0 0
    %231 = vmatpush1.bf16.msra.mxu0 %v198
    %232 = vmatprep.subr.bf16.mxu0 0
    %233 = vmatpush1.bf16.msra.mxu0 %v199
    %234 = vmatprep.subr.bf16.mxu0 0
    %235 = vmatpush1.bf16.msra.mxu0 %v200
    %236 = vmatprep.subr.bf16.mxu0 0
    %237 = vmatpush1.bf16.msra.mxu0 %v201
    %238 = vmatprep.subr.bf16.mxu0 0
    %239 = vmatpush1.bf16.msra.mxu0 %v202
    %240 = vmatprep.subr.bf16.mxu0 0
    %241 = vmatpush1.bf16.msra.mxu0 %v203
    %242 = vmatprep.subr.bf16.mxu0 0
    %243 = vmatpush1.bf16.msra.mxu0 %v204
    %244 = vmatprep.subr.bf16.mxu0 0
    %245 = vmatpush1.bf16.msra.mxu0 %v205
    %246 = vmatprep.subr.bf16.mxu0 0
    %247 = vmatpush1.bf16.msra.mxu0 %v206
    %248 = vmatprep.subr.bf16.mxu0 0
    %249 = vmatpush1.bf16.msra.mxu0 %v207
    %250 = vmatprep.subr.bf16.mxu0 0
    %251 = vmatpush1.bf16.msra.mxu0 %v208
    %252 = vmatprep.subr.bf16.mxu0 0
    %253 = vmatpush1.bf16.msra.mxu0 %v209
    %254 = vmatprep.subr.bf16.mxu0 0
    %255 = vmatpush1.bf16.msra.mxu0 %v210
    %256 = vmatprep.subr.bf16.mxu0 0
    %257 = vmatpush1.bf16.msra.mxu0 %v211
    %258 = vmatprep.subr.bf16.mxu0 0
    %259 = vmatpush1.bf16.msra.mxu0 %v212
    %260 = vmatprep.subr.bf16.mxu0 0
    %261 = vmatpush1.bf16.msra.mxu0 %v213
    %262 = vmatprep.mubr.bf16.mxu0 %v131
    %263 = vmatmul.mubr.bf16.gmra.mrb[0].mxu0 %v130
    %v264 = vpop.f32.mrb[0].mxu0
    %v265 = vadd.f32 %v122, %v264
    %v266 = vpop.f32.mrb[0].mxu0
    %v267 = vpop.f32.mrb[0].mxu0
    %v268 = vadd.f32 %v122, %v267
    %v269 = vpop.f32.mrb[0].mxu0
    %270 = vdwg.mxu0
    %vm271 = vcmp.gt.f32.partialorder %v265, 0.0
    %vm272 = vcmp.gt.f32.partialorder %v268, 0.0
    %v273 = vmul.f32 %v265, 0.2
    %v274 = vmul.f32 %v268, 0.2
    %v275 = vsel %vm271, %v265, %v273
    %v276 = vsel %vm272, %v268, %v274
    %v277 = vpack.c.bf16 %v276, %v275
    %v278 = vld [vmem:[#allocation7] sm:$0xf]
    %v279 = vld [vmem:[#allocation7 + $0x4] sm:$0xf]
    %v280 = vld [vmem:[#allocation7 + $0x8] sm:$0xf]
    %v281 = vld [vmem:[#allocation7 + $0xc] sm:$0xf]
    %v282 = vld [vmem:[#allocation7 + $0x10] sm:$0xf]
    %v283 = vld [vmem:[#allocation7 + $0x14] sm:$0xf]
    %v284 = vld [vmem:[#allocation7 + $0x18] sm:$0xf]
    %v285 = vld [vmem:[#allocation7 + $0x1c] sm:$0xf]
    %v286 = vld [vmem:[#allocation7 + $0x20] sm:$0xf]
    %v287 = vld [vmem:[#allocation7 + $0x24] sm:$0xf]
    %v288 = vld [vmem:[#allocation7 + $0x28] sm:$0xf]
    %v289 = vld [vmem:[#allocation7 + $0x2c] sm:$0xf]
    %v290 = vld [vmem:[#allocation7 + $0x30] sm:$0xf]
    %v291 = vld [vmem:[#allocation7 + $0x34] sm:$0xf]
    %v292 = vld [vmem:[#allocation7 + $0x38] sm:$0xf]
    %v293 = vld [vmem:[#allocation7 + $0x3c] sm:$0xf]
    %v294 = vld [vmem:[%s4] sm:$0x1]
    %v296 = vlaneseq
    %v297 = vshrl.u32 %v296, 7
    %v298 = vsub.s32 0, %v297
    %v299 = vrot.slane %v294, %v298
    %v317 = vunpack.c.l.b16 %v278
    %v318 = vunpack.c.l.b16 %v279
    %v319 = vunpack.c.l.b16 %v280
    %v320 = vunpack.c.l.b16 %v281
    %v321 = vunpack.c.l.b16 %v282
    %v322 = vunpack.c.l.b16 %v283
    %v323 = vunpack.c.l.b16 %v284
    %v324 = vunpack.c.l.b16 %v285
    %v325 = vunpack.c.l.b16 %v286
    %v326 = vunpack.c.l.b16 %v287
    %v327 = vunpack.c.l.b16 %v288
    %v328 = vunpack.c.l.b16 %v289
    %v329 = vunpack.c.l.b16 %v290
    %v330 = vunpack.c.l.b16 %v291
    %v331 = vunpack.c.l.b16 %v292
    %v332 = vunpack.c.l.b16 %v293
    %v333 = vpack.c.b16 %v318, %v317
    %v334 = vpack.c.b16 %v320, %v319
    %v335 = vpack.c.b16 %v322, %v321
    %v336 = vpack.c.b16 %v324, %v323
    %v337 = vpack.c.b16 %v326, %v325
    %v338 = vpack.c.b16 %v328, %v327
    %v339 = vpack.c.b16 %v330, %v329
    %v340 = vpack.c.b16 %v332, %v331
    %349 = vmatprep.subr.bf16.mxu0 0
    %350 = vmatpush1.bf16.msra.mxu0 %v333
    %351 = vmatprep.subr.bf16.mxu0 0
    %352 = vmatpush1.bf16.msra.mxu0 %v334
    %353 = vmatprep.subr.bf16.mxu0 0
    %354 = vmatpush1.bf16.msra.mxu0 %v335
    %355 = vmatprep.subr.bf16.mxu0 0
    %356 = vmatpush1.bf16.msra.mxu0 %v336
    %357 = vmatprep.subr.bf16.mxu0 0
    %358 = vmatpush1.bf16.msra.mxu0 %v337
    %359 = vmatprep.subr.bf16.mxu0 0
    %360 = vmatpush1.bf16.msra.mxu0 %v338
    %361 = vmatprep.subr.bf16.mxu0 0
    %362 = vmatpush1.bf16.msra.mxu0 %v339
    %363 = vmatprep.subr.bf16.mxu0 0
    %364 = vmatpush1.bf16.msra.mxu0 %v340
    %365 = vmatprep.subr.bf16.mxu0 0
    %366 = vmatpush1.bf16.msra.mxu0 0
    %367 = vmatprep.subr.bf16.mxu0 0
    %368 = vmatpush1.bf16.msra.mxu0 0
    %369 = vmatprep.subr.bf16.mxu0 0
    %370 = vmatpush1.bf16.msra.mxu0 0
    %371 = vmatprep.subr.bf16.mxu0 0
    %372 = vmatpush1.bf16.msra.mxu0 0
    %373 = vmatprep.subr.bf16.mxu0 0
    %374 = vmatpush1.bf16.msra.mxu0 0
    %375 = vmatprep.subr.bf16.mxu0 0
    %376 = vmatpush1.bf16.msra.mxu0 0
    %377 = vmatprep.subr.bf16.mxu0 0
    %378 = vmatpush1.bf16.msra.mxu0 0
    %379 = vmatprep.subr.bf16.mxu0 0
    %380 = vmatpush1.bf16.msra.mxu0 0
    %381 = vmatprep.mubr.bf16.mxu0 0
    %382 = vmatmul.mubr.bf16.gmra.mrb[0].mxu0 %v277
    %v383 = vpop.f32.mrb[0].mxu0
    %v384 = vadd.f32 %v299, %v383
    %v385 = vpop.f32.mrb[0].mxu0
    %v386 = vpop.f32.mrb[0].mxu0
    %v387 = vadd.f32 %v299, %v386
    %v388 = vpop.f32.mrb[0].mxu0
    %389 = vdwg.mxu0
    %vm390 = vcmp.gt.f32.partialorder %v384, 0.0
    %vm391 = vcmp.gt.f32.partialorder %v387, 0.0
    %v392 = vmul.f32 %v384, 0.2
    %v393 = vmul.f32 %v387, 0.2
    %v394 = vsel %vm390, %v384, %v392
    %v395 = vsel %vm391, %v387, %v393
    %v396 = vpack.c.bf16 %v395, %v394
    %v397 = vld [vmem:[#allocation8] sm:$0xf]
    %v398 = vld [vmem:[#allocation8 + $0x4] sm:$0xf]
    %v399 = vld [vmem:[#allocation8 + $0x8] sm:$0xf]
    %v400 = vld [vmem:[#allocation8 + $0xc] sm:$0xf]
    %v401 = vld [vmem:[#allocation8 + $0x10] sm:$0xf]
    %v402 = vld [vmem:[#allocation8 + $0x14] sm:$0xf]
    %v403 = vld [vmem:[#allocation8 + $0x18] sm:$0xf]
    %v404 = vld [vmem:[#allocation8 + $0x1c] sm:$0xf]
    %v405 = vld [vmem:[#allocation8 + $0x20] sm:$0xf]
    %v406 = vld [vmem:[#allocation8 + $0x24] sm:$0xf]
    %v407 = vld [vmem:[#allocation8 + $0x28] sm:$0xf]
    %v408 = vld [vmem:[#allocation8 + $0x2c] sm:$0xf]
    %v409 = vld [vmem:[#allocation8 + $0x30] sm:$0xf]
    %v410 = vld [vmem:[#allocation8 + $0x34] sm:$0xf]
    %v411 = vld [vmem:[#allocation8 + $0x38] sm:$0xf]
    %v412 = vld [vmem:[#allocation8 + $0x3c] sm:$0xf]
    %v413 = vld [vmem:[%s6] sm:$0x1]
    %v415 = vlaneseq
    %v416 = vshrl.u32 %v415, 7
    %v417 = vsub.s32 0, %v416
    %v418 = vrot.slane %v413, %v417
    %v436 = vunpack.c.l.b16 %v397
    %v437 = vunpack.c.l.b16 %v398
    %v438 = vunpack.c.l.b16 %v399
    %v439 = vunpack.c.l.b16 %v400
    %v440 = vunpack.c.l.b16 %v401
    %v441 = vunpack.c.l.b16 %v402
    %v442 = vunpack.c.l.b16 %v403
    %v443 = vunpack.c.l.b16 %v404
    %v444 = vunpack.c.l.b16 %v405
    %v445 = vunpack.c.l.b16 %v406
    %v446 = vunpack.c.l.b16 %v407
    %v447 = vunpack.c.l.b16 %v408
    %v448 = vunpack.c.l.b16 %v409
    %v449 = vunpack.c.l.b16 %v410
    %v450 = vunpack.c.l.b16 %v411
    %v451 = vunpack.c.l.b16 %v412
    %v452 = vpack.c.b16 %v437, %v436
    %v453 = vpack.c.b16 %v439, %v438
    %v454 = vpack.c.b16 %v441, %v440
    %v455 = vpack.c.b16 %v443, %v442
    %v456 = vpack.c.b16 %v445, %v444
    %v457 = vpack.c.b16 %v447, %v446
    %v458 = vpack.c.b16 %v449, %v448
    %v459 = vpack.c.b16 %v451, %v450
    %468 = vmatprep.subr.bf16.mxu0 0
    %469 = vmatpush1.bf16.msra.mxu0 %v452
    %470 = vmatprep.subr.bf16.mxu0 0
    %471 = vmatpush1.bf16.msra.mxu0 %v453
    %472 = vmatprep.subr.bf16.mxu0 0
    %473 = vmatpush1.bf16.msra.mxu0 %v454
    %474 = vmatprep.subr.bf16.mxu0 0
    %475 = vmatpush1.bf16.msra.mxu0 %v455
    %476 = vmatprep.subr.bf16.mxu0 0
    %477 = vmatpush1.bf16.msra.mxu0 %v456
    %478 = vmatprep.subr.bf16.mxu0 0
    %479 = vmatpush1.bf16.msra.mxu0 %v457
    %480 = vmatprep.subr.bf16.mxu0 0
    %481 = vmatpush1.bf16.msra.mxu0 %v458
    %482 = vmatprep.subr.bf16.mxu0 0
    %483 = vmatpush1.bf16.msra.mxu0 %v459
    %484 = vmatprep.subr.bf16.mxu0 0
    %485 = vmatpush1.bf16.msra.mxu0 0
    %486 = vmatprep.subr.bf16.mxu0 0
    %487 = vmatpush1.bf16.msra.mxu0 0
    %488 = vmatprep.subr.bf16.mxu0 0
    %489 = vmatpush1.bf16.msra.mxu0 0
    %490 = vmatprep.subr.bf16.mxu0 0
    %491 = vmatpush1.bf16.msra.mxu0 0
    %492 = vmatprep.subr.bf16.mxu0 0
    %493 = vmatpush1.bf16.msra.mxu0 0
    %494 = vmatprep.subr.bf16.mxu0 0
    %495 = vmatpush1.bf16.msra.mxu0 0
    %496 = vmatprep.subr.bf16.mxu0 0
    %497 = vmatpush1.bf16.msra.mxu0 0
    %498 = vmatprep.subr.bf16.mxu0 0
    %499 = vmatpush1.bf16.msra.mxu0 0
    %500 = vmatprep.mubr.bf16.mxu0 0
    %501 = vmatmul.mubr.bf16.gmra.mrb[0].mxu0 %v396
    %v502 = vpop.f32.mrb[0].mxu0
    %v503 = vadd.f32 %v418, %v502
    %v504 = vpop.f32.mrb[0].mxu0
    %v505 = vpop.f32.mrb[0].mxu0
    %v506 = vadd.f32 %v418, %v505
    %v507 = vpop.f32.mrb[0].mxu0
    %508 = vdwg.mxu0
    %v509 = vpack.c.bf16 %v506, %v503
    %v511 = vunpack.c.l.b16 %v509
    %v512 = vunpack.c.h.b16 %v509
    %v513 = vpack.c.b16 %v511, %v511
    %v514 = vpack.c.b16 %v512, %v512
    %517 = vst [vmem:[#allocation10] sm:$0xf] %v513
    %518 = vst [vmem:[#allocation10 + $0x4] sm:$0xf] %v514
    // Predicated region
    $region46: #{tpu_custom_call.1} parent=1 // pred_check
      _
    $region47: #{tpu_custom_call.1} parent=1 // pred_check_branch
      %520 = sbr.rel (0) target = $region49
    $region48: #{tpu_custom_call.1} parent=1 // pred_region
      %s522 = ssub.s32 128, 128
      %523 = vsyncadd [#allocation4], %s522
      %s524 = sshll.u32 [#allocation10], 4
      %s525 = int_to_ptr.vmem [resolvable:$true] %s524
      %530 = dma.vmem_to_hbm [thread:$0]  %s525, 128, %s7, [#allocation4], 64, 64, 4
    $region49: #{tpu_custom_call.1} parent=1 // pred_fallthru
      _
    // Predicated region
    $region50: #{tpu_custom_call.1} parent=1 // pred_check
      _
    $region51: #{tpu_custom_call.1} parent=1 // pred_check_branch
      %532 = sbr.rel (0) target = $region53
    $region52: #{tpu_custom_call.1} parent=1 // pred_region
      %533 = dma.done [#allocation4], 128
    $region53: #{tpu_custom_call.1} parent=1 // pred_fallthru
      _
    %534 = vsyncpa [#allocation3], 1
    %535 = vsyncpa [#allocation6], 1
    %536 = vsyncpa [#allocation9], 1
    %537 = vsyncpa [#allocation4], 1

// kernel: tpu_custom_call.1
$region0: #{tpu_custom_call.1}
  #allocation0 [shape = 'u32[]', space=smem, size = 0x4, offset = 0x4, fixed_abs, tag = 'smem constant byte address 0x4 - core index']
  #allocation1 [shape = 'u32[144,128]{1,0:T(1,128)}', space=vmem, size = 0x12000, scoped, tag = 'internal scratch']
  %s0 = inlined_call_operand.hbm [shape: bf16[16,256], index: 0, kind: input, shape index: {}]
  %s1 = inlined_call_operand.hbm [shape: bf16[256,128], index: 1, kind: input, shape index: {}]
  %s2 = inlined_call_operand.vmem [shape: f32[1,128], index: 2, kind: input, shape index: {}]
  %s3 = inlined_call_operand.hbm [shape: bf16[128,128], index: 3, kind: input, shape index: {}]
  %s4 = inlined_call_operand.vmem [shape: f32[1,128], index: 4, kind: input, shape index: {}]
  %s5 = inlined_call_operand.hbm [shape: bf16[128,128], index: 5, kind: input, shape index: {}]
  %s6 = inlined_call_operand.vmem [shape: f32[1,128], index: 6, kind: input, shape index: {}]
  %s7 = inlined_call_operand.hbm [shape: bf16[16,128], index: 7, kind: output, shape index: {}]
  %s8 = sld [smem:[#allocation0]]
  $region54: #{tpu_custom_call.1} parent=0
    _
  %s10 = ssub.s32 1, %s8
  %s11 = scalar_select 0, %s10, %s8
  $region1: #{tpu_custom_call.1} parent=0
    #allocation2 [shape = 'u8[8192]{0}', space=vmem, size = 0x2000, scoped, tag = 'input window, operand 0, single buffered']
    #allocation3 [shape = 's32[1]{0}', space=sflag, size = 0x4, scoped, tag = 'scoped memory for tpu_custom_call.1']
    #allocation4 [shape = 's32[1]{0}', space=sflag, size = 0x4, scoped, tag = 'scoped memory for tpu_custom_call.1']
    #allocation5 [shape = 'u8[65536]{0}', space=vmem, size = 0x10000, scoped, tag = 'input window, operand 1, single buffered']
    #allocation6 [shape = 's32[1]{0}', space=sflag, size = 0x4, scoped, tag = 'scoped memory for tpu_custom_call.1']
    #allocation7 [shape = 'u8[32768]{0}', space=vmem, size = 0x8000, scoped, tag = 'input window, operand 3, single buffered']
    #allocation8 [shape = 'u8[32768]{0}', space=vmem, size = 0x8000, scoped, tag = 'input window, operand 5, single buffered']
    #allocation9 [shape = 's32[1]{0}', space=sflag, size = 0x4, scoped, tag = 'scoped memory for tpu_custom_call.1']
    #allocation10 [shape = 'u8[4096]{0}', space=vmem, size = 0x1000, scoped, tag = 'output window, operand 0, single buffered']
    %12 = vsyncpa [#allocation3], 0
    %13 = vsyncpa [#allocation6], 0
    %14 = vsyncpa [#allocation9], 0
    %15 = vsyncpa [#allocation4], 0
    // Predicated region
    $region2: #{tpu_custom_call.1} parent=1 // pred_check
      _
    $region3: #{tpu_custom_call.1} parent=1 // pred_check_branch
      %17 = sbr.rel (0) target = $region5
    $region4: #{tpu_custom_call.1} parent=1 // pred_region
      %s19 = ssub.s32 256, 256
      %20 = vsyncadd [#allocation3], %s19
      %s21 = sshll.u32 [#allocation2], 4
      %s22 = int_to_ptr.vmem [resolvable:$true] %s21
      %27 = dma.hbm_to_vmem [thread:$0]  %s0, 256, %s22, [#allocation3], 128, 128, 8
    $region5: #{tpu_custom_call.1} parent=1 // pred_fallthru
      _
    // Predicated region
    $region6: #{tpu_custom_call.1} parent=1 // pred_check
      _
    $region7: #{tpu_custom_call.1} parent=1 // pred_check_branch
      %29 = sbr.rel (0) target = $region9
    $region8: #{tpu_custom_call.1} parent=1 // pred_region
      %s31 = ssub.s32 2048, 2048
      %32 = vsyncadd [#allocation6], %s31
      %s33 = sshll.u32 [#allocation5], 4
      %s34 = int_to_ptr.vmem [resolvable:$true] %s33
      %39 = dma.hbm_to_vmem [thread:$0]  %s1, 2048, %s34, [#allocation6], 64, 64, 4
    $region9: #{tpu_custom_call.1} parent=1 // pred_fallthru
      _
    // Predicated region
    $region10: #{tpu_custom_call.1} parent=1 // pred_check
      _
    $region11: #{tpu_custom_call.1} parent=1 // pred_check_branch
      %41 = sbr.rel (0) target = $region13
    $region12: #{tpu_custom_call.1} parent=1 // pred_region
      _
    $region13: #{tpu_custom_call.1} parent=1 // pred_fallthru
      _
    // Predicated region
    $region14: #{tpu_custom_call.1} parent=1 // pred_check
      _
    $region15: #{tpu_custom_call.1} parent=1 // pred_check_branch
      %43 = sbr.rel (0) target = $region17
    $region16: #{tpu_custom_call.1} parent=1 // pred_region
      %s45 = ssub.s32 1024, 1024
      %46 = vsyncadd [#allocation6], %s45
      %s47 = sshll.u32 [#allocation7], 4
      %s48 = int_to_ptr.vmem [resolvable:$true] %s47
      %53 = dma.hbm_to_vmem [thread:$0]  %s3, 1024, %s48, [#allocation6], 64, 64, 4
    $region17: #{tpu_custom_call.1} parent=1 // pred_fallthru
      _
    // Predicated region
    $region18: #{tpu_custom_call.1} parent=1 // pred_check
      _
    $region19: #{tpu_custom_call.1} parent=1 // pred_check_branch
      %55 = sbr.rel (0) target = $region21
    $region20: #{tpu_custom_call.1} parent=1 // pred_region
      _
    $region21: #{tpu_custom_call.1} parent=1 // pred_fallthru
      _
    // Predicated region
    $region22: #{tpu_custom_call.1} parent=1 // pred_check
      _
    $region23: #{tpu_custom_call.1} parent=1 // pred_check_branch
      %57 = sbr.rel (0) target = $region25
    $region24: #{tpu_custom_call.1} parent=1 // pred_region
      %s59 = ssub.s32 1024, 1024
      %60 = vsyncadd [#allocation9], %s59
      %s61 = sshll.u32 [#allocation8], 4
      %s62 = int_to_ptr.vmem [resolvable:$true] %s61
      %67 = dma.hbm_to_vmem [thread:$0]  %s5, 1024, %s62, [#allocation9], 64, 64, 4
    $region25: #{tpu_custom_call.1} parent=1 // pred_fallthru
      _
    // Predicated region
    $region26: #{tpu_custom_call.1} parent=1 // pred_check
      _
    $region27: #{tpu_custom_call.1} parent=1 // pred_check_branch
      %69 = sbr.rel (0) target = $region29
    $region28: #{tpu_custom_call.1} parent=1 // pred_region
      _
    $region29: #{tpu_custom_call.1} parent=1 // pred_fallthru
      _
    // Predicated region
    $region30: #{tpu_custom_call.1} parent=1 // pred_check
      _
    $region31: #{tpu_custom_call.1} parent=1 // pred_check_branch
      %71 = sbr.rel (0) target = $region33
    $region32: #{tpu_custom_call.1} parent=1 // pred_region
      %72 = dma.done [#allocation3], 256
    $region33: #{tpu_custom_call.1} parent=1 // pred_fallthru
      _
    // Predicated region
    $region34: #{tpu_custom_call.1} parent=1 // pred_check
      _
    $region35: #{tpu_custom_call.1} parent=1 // pred_check_branch
      %74 = sbr.rel (0) target = $region37
    $region36: #{tpu_custom_call.1} parent=1 // pred_region
      %75 = dma.done [#allocation6], 2048
    $region37: #{tpu_custom_call.1} parent=1 // pred_fallthru
      _
    // Predicated region
    $region38: #{tpu_custom_call.1} parent=1 // pred_check
      _
    $region39: #{tpu_custom_call.1} parent=1 // pred_check_branch
      %77 = sbr.rel (0) target = $region41
    $region40: #{tpu_custom_call.1} parent=1 // pred_region
      %78 = dma.done [#allocation6], 1024
    $region41: #{tpu_custom_call.1} parent=1 // pred_fallthru
      _
    // Predicated region
    $region42: #{tpu_custom_call.1} parent=1 // pred_check
      _
    $region43: #{tpu_custom_call.1} parent=1 // pred_check_branch
      %80 = sbr.rel (0) target = $region45
    $region44: #{tpu_custom_call.1} parent=1 // pred_region
      %81 = dma.done [#allocation9], 1024
    $region45: #{tpu_custom_call.1} parent=1 // pred_fallthru
      _
    %v83 = vld [vmem:[#allocation2] sm:$0xff]
    %v84 = vld [vmem:[#allocation2 + $0x8] sm:$0xff]
    %v85 = vld [vmem:[#allocation5] sm:$0xf]
    %v86 = vld [vmem:[#allocation5 + $0x4] sm:$0xf]
    %v87 = vld [vmem:[#allocation5 + $0x8] sm:$0xf]
    %v88 = vld [vmem:[#allocation5 + $0xc] sm:$0xf]
    %v89 = vld [vmem:[#allocation5 + $0x10] sm:$0xf]
    %v90 = vld [vmem:[#allocation5 + $0x14] sm:$0xf]
    %v91 = vld [vmem:[#allocation5 + $0x18] sm:$0xf]
    %v92 = vld [vmem:[#allocation5 + $0x1c] sm:$0xf]
    %v93 = vld [vmem:[#allocation5 + $0x20] sm:$0xf]
    %v94 = vld [vmem:[#allocation5 + $0x24] sm:$0xf]
    %v95 = vld [vmem:[#allocation5 + $0x28] sm:$0xf]
    %v96 = vld [vmem:[#allocation5 + $0x2c] sm:$0xf]
    %v97 = vld [vmem:[#allocation5 + $0x30] sm:$0xf]
    %v98 = vld [vmem:[#allocation5 + $0x34] sm:$0xf]
    %v99 = vld [vmem:[#allocation5 + $0x38] sm:$0xf]
    %v100 = vld [vmem:[#allocation5 + $0x3c] sm:$0xf]
    %v101 = vld [vmem:[#allocation5 + $0x40] sm:$0xf]
    %v102 = vld [vmem:[#allocation5 + $0x44] sm:$0xf]
    %v103 = vld [vmem:[#allocation5 + $0x48] sm:$0xf]
    %v104 = vld [vmem:[#allocation5 + $0x4c] sm:$0xf]
    %v105 = vld [vmem:[#allocation5 + $0x50] sm:$0xf]
    %v106 = vld [vmem:[#allocation5 + $0x54] sm:$0xf]
    %v107 = vld [vmem:[#allocation5 + $0x58] sm:$0xf]
    %v108 = vld [vmem:[#allocation5 + $0x5c] sm:$0xf]
    %v109 = vld [vmem:[#allocation5 + $0x60] sm:$0xf]
    %v110 = vld [vmem:[#allocation5 + $0x64] sm:$0xf]
    %v111 = vld [vmem:[#allocation5 + $0x68] sm:$0xf]
    %v112 = vld [vmem:[#allocation5 + $0x6c] sm:$0xf]
    %v113 = vld [vmem:[#allocation5 + $0x70] sm:$0xf]
    %v114 = vld [vmem:[#allocation5 + $0x74] sm:$0xf]
    %v115 = vld [vmem:[#allocation5 + $0x78] sm:$0xf]
    %v116 = vld [vmem:[#allocation5 + $0x7c] sm:$0xf]
    %v117 = vld [vmem:[%s2] sm:$0x1]
    %v119 = vlaneseq
    %v120 = vshrl.u32 %v119, 7
    %v121 = vsub.s32 0, %v120
    %v122 = vrot.slane %v117, %v121
    %v126 = vunpack.c.l.b16 %v83
    %v127 = vunpack.c.h.b16 %v83
    %v128 = vunpack.c.l.b16 %v84
    %v129 = vunpack.c.h.b16 %v84
    %v130 = vpack.c.b16 %v128, %v126
    %v131 = vpack.c.b16 %v129, %v127
    %v166 = vunpack.c.l.b16 %v85
    %v167 = vunpack.c.l.b16 %v86
    %v168 = vunpack.c.l.b16 %v87
    %v169 = vunpack.c.l.b16 %v88
    %v170 = vunpack.c.l.b16 %v89
    %v171 = vunpack.c.l.b16 %v90
    %v172 = vunpack.c.l.b16 %v91
    %v173 = vunpack.c.l.b16 %v92
    %v174 = vunpack.c.l.b16 %v93
    %v175 = vunpack.c.l.b16 %v94
    %v176 = vunpack.c.l.b16 %v95
    %v177 = vunpack.c.l.b16 %v96
    %v178 = vunpack.c.l.b16 %v97
    %v179 = vunpack.c.l.b16 %v98
    %v180 = vunpack.c.l.b16 %v99
    %v181 = vunpack.c.l.b16 %v100
    %v182 = vunpack.c.l.b16 %v101
    %v183 = vunpack.c.l.b16 %v102
    %v184 = vunpack.c.l.b16 %v103
    %v185 = vunpack.c.l.b16 %v104
    %v186 = vunpack.c.l.b16 %v105
    %v187 = vunpack.c.l.b16 %v106
    %v188 = vunpack.c.l.b16 %v107
    %v189 = vunpack.c.l.b16 %v108
    %v190 = vunpack.c.l.b16 %v109
    %v191 = vunpack.c.l.b16 %v110
    %v192 = vunpack.c.l.b16 %v111
    %v193 = vunpack.c.l.b16 %v112
    %v194 = vunpack.c.l.b16 %v113
    %v195 = vunpack.c.l.b16 %v114
    %v196 = vunpack.c.l.b16 %v115
    %v197 = vunpack.c.l.b16 %v116
    %v198 = vpack.c.b16 %v167, %v166
    %v199 = vpack.c.b16 %v169, %v168
    %v200 = vpack.c.b16 %v171, %v170
    %v201 = vpack.c.b16 %v173, %v172
    %v202 = vpack.c.b16 %v175, %v174
    %v203 = vpack.c.b16 %v177, %v176
    %v204 = vpack.c.b16 %v179, %v178
    %v205 = vpack.c.b16 %v181, %v180
    %v206 = vpack.c.b16 %v183, %v182
    %v207 = vpack.c.b16 %v185, %v184
    %v208 = vpack.c.b16 %v187, %v186
    %v209 = vpack.c.b16 %v189, %v188
    %v210 = vpack.c.b16 %v191, %v190
    %v211 = vpack.c.b16 %v193, %v192
    %v212 = vpack.c.b16 %v195, %v194
    %v213 = vpack.c.b16 %v197, %v196
    %230 = vmatprep.subr.bf16.mxu0 0
    %231 = vmatpush1.bf16.msra.mxu0 %v198
    %232 = vmatprep.subr.bf16.mxu0 0
    %233 = vmatpush1.bf16.msra.mxu0 %v199
    %234 = vmatprep.subr.bf16.mxu0 0
    %235 = vmatpush1.bf16.msra.mxu0 %v200
    %236 = vmatprep.subr.bf16.mxu0 0
    %237 = vmatpush1.bf16.msra.mxu0 %v201
    %238 = vmatprep.subr.bf16.mxu0 0
    %239 = vmatpush1.bf16.msra.mxu0 %v202
    %240 = vmatprep.subr.bf16.mxu0 0
    %241 = vmatpush1.bf16.msra.mxu0 %v203
    %242 = vmatprep.subr.bf16.mxu0 0
    %243 = vmatpush1.bf16.msra.mxu0 %v204
    %244 = vmatprep.subr.bf16.mxu0 0
    %245 = vmatpush1.bf16.msra.mxu0 %v205
    %246 = vmatprep.subr.bf16.mxu0 0
    %247 = vmatpush1.bf16.msra.mxu0 %v206
    %248 = vmatprep.subr.bf16.mxu0 0
    %249 = vmatpush1.bf16.msra.mxu0 %v207
    %250 = vmatprep.subr.bf16.mxu0 0
    %251 = vmatpush1.bf16.msra.mxu0 %v208
    %252 = vmatprep.subr.bf16.mxu0 0
    %253 = vmatpush1.bf16.msra.mxu0 %v209
    %254 = vmatprep.subr.bf16.mxu0 0
    %255 = vmatpush1.bf16.msra.mxu0 %v210
    %256 = vmatprep.subr.bf16.mxu0 0
    %257 = vmatpush1.bf16.msra.mxu0 %v211
    %258 = vmatprep.subr.bf16.mxu0 0
    %259 = vmatpush1.bf16.msra.mxu0 %v212
    %260 = vmatprep.subr.bf16.mxu0 0
    %261 = vmatpush1.bf16.msra.mxu0 %v213
    %262 = vmatprep.mubr.bf16.mxu0 %v131
    %263 = vmatmul.mubr.bf16.gmra.mrb[0].mxu0 %v130
    %v264 = vpop.f32.mrb[0].mxu0
    %v265 = vadd.f32 %v122, %v264
    %v266 = vpop.f32.mrb[0].mxu0
    %v267 = vpop.f32.mrb[0].mxu0
    %v268 = vadd.f32 %v122, %v267
    %v269 = vpop.f32.mrb[0].mxu0
    %270 = vdwg.mxu0
    %vm271 = vcmp.gt.f32.partialorder %v265, 0.0
    %vm272 = vcmp.gt.f32.partialorder %v268, 0.0
    %v273 = vmul.f32 %v265, 0.2
    %v274 = vmul.f32 %v268, 0.2
    %v275 = vsel %vm271, %v265, %v273
    %v276 = vsel %vm272, %v268, %v274
    %v277 = vpack.c.bf16 %v276, %v275
    %v278 = vld [vmem:[#allocation7] sm:$0xf]
    %v279 = vld [vmem:[#allocation7 + $0x4] sm:$0xf]
    %v280 = vld [vmem:[#allocation7 + $0x8] sm:$0xf]
    %v281 = vld [vmem:[#allocation7 + $0xc] sm:$0xf]
    %v282 = vld [vmem:[#allocation7 + $0x10] sm:$0xf]
    %v283 = vld [vmem:[#allocation7 + $0x14] sm:$0xf]
    %v284 = vld [vmem:[#allocation7 + $0x18] sm:$0xf]
    %v285 = vld [vmem:[#allocation7 + $0x1c] sm:$0xf]
    %v286 = vld [vmem:[#allocation7 + $0x20] sm:$0xf]
    %v287 = vld [vmem:[#allocation7 + $0x24] sm:$0xf]
    %v288 = vld [vmem:[#allocation7 + $0x28] sm:$0xf]
    %v289 = vld [vmem:[#allocation7 + $0x2c] sm:$0xf]
    %v290 = vld [vmem:[#allocation7 + $0x30] sm:$0xf]
    %v291 = vld [vmem:[#allocation7 + $0x34] sm:$0xf]
    %v292 = vld [vmem:[#allocation7 + $0x38] sm:$0xf]
    %v293 = vld [vmem:[#allocation7 + $0x3c] sm:$0xf]
    %v294 = vld [vmem:[%s4] sm:$0x1]
    %v296 = vlaneseq
    %v297 = vshrl.u32 %v296, 7
    %v298 = vsub.s32 0, %v297
    %v299 = vrot.slane %v294, %v298
    %v317 = vunpack.c.l.b16 %v278
    %v318 = vunpack.c.l.b16 %v279
    %v319 = vunpack.c.l.b16 %v280
    %v320 = vunpack.c.l.b16 %v281
    %v321 = vunpack.c.l.b16 %v282
    %v322 = vunpack.c.l.b16 %v283
    %v323 = vunpack.c.l.b16 %v284
    %v324 = vunpack.c.l.b16 %v285
    %v325 = vunpack.c.l.b16 %v286
    %v326 = vunpack.c.l.b16 %v287
    %v327 = vunpack.c.l.b16 %v288
    %v328 = vunpack.c.l.b16 %v289
    %v329 = vunpack.c.l.b16 %v290
    %v330 = vunpack.c.l.b16 %v291
    %v331 = vunpack.c.l.b16 %v292
    %v332 = vunpack.c.l.b16 %v293
    %v333 = vpack.c.b16 %v318, %v317
    %v334 = vpack.c.b16 %v320, %v319
    %v335 = vpack.c.b16 %v322, %v321
    %v336 = vpack.c.b16 %v324, %v323
    %v337 = vpack.c.b16 %v326, %v325
    %v338 = vpack.c.b16 %v328, %v327
    %v339 = vpack.c.b16 %v330, %v329
    %v340 = vpack.c.b16 %v332, %v331
    %349 = vmatprep.subr.bf16.mxu0 0
    %350 = vmatpush1.bf16.msra.mxu0 %v333
    %351 = vmatprep.subr.bf16.mxu0 0
    %352 = vmatpush1.bf16.msra.mxu0 %v334
    %353 = vmatprep.subr.bf16.mxu0 0
    %354 = vmatpush1.bf16.msra.mxu0 %v335
    %355 = vmatprep.subr.bf16.mxu0 0
    %356 = vmatpush1.bf16.msra.mxu0 %v336
    %357 = vmatprep.subr.bf16.mxu0 0
    %358 = vmatpush1.bf16.msra.mxu0 %v337
    %359 = vmatprep.subr.bf16.mxu0 0
    %360 = vmatpush1.bf16.msra.mxu0 %v338
    %361 = vmatprep.subr.bf16.mxu0 0
    %362 = vmatpush1.bf16.msra.mxu0 %v339
    %363 = vmatprep.subr.bf16.mxu0 0
    %364 = vmatpush1.bf16.msra.mxu0 %v340
    %365 = vmatprep.subr.bf16.mxu0 0
    %366 = vmatpush1.bf16.msra.mxu0 0
    %367 = vmatprep.subr.bf16.mxu0 0
    %368 = vmatpush1.bf16.msra.mxu0 0
    %369 = vmatprep.subr.bf16.mxu0 0
    %370 = vmatpush1.bf16.msra.mxu0 0
    %371 = vmatprep.subr.bf16.mxu0 0
    %372 = vmatpush1.bf16.msra.mxu0 0
    %373 = vmatprep.subr.bf16.mxu0 0
    %374 = vmatpush1.bf16.msra.mxu0 0
    %375 = vmatprep.subr.bf16.mxu0 0
    %376 = vmatpush1.bf16.msra.mxu0 0
    %377 = vmatprep.subr.bf16.mxu0 0
    %378 = vmatpush1.bf16.msra.mxu0 0
    %379 = vmatprep.subr.bf16.mxu0 0
    %380 = vmatpush1.bf16.msra.mxu0 0
    %381 = vmatprep.mubr.bf16.mxu0 0
    %382 = vmatmul.mubr.bf16.gmra.mrb[0].mxu0 %v277
    %v383 = vpop.f32.mrb[0].mxu0
    %v384 = vadd.f32 %v299, %v383
    %v385 = vpop.f32.mrb[0].mxu0
    %v386 = vpop.f32.mrb[0].mxu0
    %v387 = vadd.f32 %v299, %v386
    %v388 = vpop.f32.mrb[0].mxu0
    %389 = vdwg.mxu0
    %vm390 = vcmp.gt.f32.partialorder %v384, 0.0
    %vm391 = vcmp.gt.f32.partialorder %v387, 0.0
    %v392 = vmul.f32 %v384, 0.2
    %v393 = vmul.f32 %v387, 0.2
    %v394 = vsel %vm390, %v384, %v392
    %v395 = vsel %vm391, %v387, %v393
    %v396 = vpack.c.bf16 %v395, %v394
    %v397 = vld [vmem:[#allocation8] sm:$0xf]
    %v398 = vld [vmem:[#allocation8 + $0x4] sm:$0xf]
    %v399 = vld [vmem:[#allocation8 + $0x8] sm:$0xf]
    %v400 = vld [vmem:[#allocation8 + $0xc] sm:$0xf]
    %v401 = vld [vmem:[#allocation8 + $0x10] sm:$0xf]
    %v402 = vld [vmem:[#allocation8 + $0x14] sm:$0xf]
    %v403 = vld [vmem:[#allocation8 + $0x18] sm:$0xf]
    %v404 = vld [vmem:[#allocation8 + $0x1c] sm:$0xf]
    %v405 = vld [vmem:[#allocation8 + $0x20] sm:$0xf]
    %v406 = vld [vmem:[#allocation8 + $0x24] sm:$0xf]
    %v407 = vld [vmem:[#allocation8 + $0x28] sm:$0xf]
    %v408 = vld [vmem:[#allocation8 + $0x2c] sm:$0xf]
    %v409 = vld [vmem:[#allocation8 + $0x30] sm:$0xf]
    %v410 = vld [vmem:[#allocation8 + $0x34] sm:$0xf]
    %v411 = vld [vmem:[#allocation8 + $0x38] sm:$0xf]
    %v412 = vld [vmem:[#allocation8 + $0x3c] sm:$0xf]
    %v413 = vld [vmem:[%s6] sm:$0x1]
    %v415 = vlaneseq
    %v416 = vshrl.u32 %v415, 7
    %v417 = vsub.s32 0, %v416
    %v418 = vrot.slane %v413, %v417
    %v436 = vunpack.c.l.b16 %v397
    %v437 = vunpack.c.l.b16 %v398
    %v438 = vunpack.c.l.b16 %v399
    %v439 = vunpack.c.l.b16 %v400
    %v440 = vunpack.c.l.b16 %v401
    %v441 = vunpack.c.l.b16 %v402
    %v442 = vunpack.c.l.b16 %v403
    %v443 = vunpack.c.l.b16 %v404
    %v444 = vunpack.c.l.b16 %v405
    %v445 = vunpack.c.l.b16 %v406
    %v446 = vunpack.c.l.b16 %v407
    %v447 = vunpack.c.l.b16 %v408
    %v448 = vunpack.c.l.b16 %v409
    %v449 = vunpack.c.l.b16 %v410
    %v450 = vunpack.c.l.b16 %v411
    %v451 = vunpack.c.l.b16 %v412
    %v452 = vpack.c.b16 %v437, %v436
    %v453 = vpack.c.b16 %v439, %v438
    %v454 = vpack.c.b16 %v441, %v440
    %v455 = vpack.c.b16 %v443, %v442
    %v456 = vpack.c.b16 %v445, %v444
    %v457 = vpack.c.b16 %v447, %v446
    %v458 = vpack.c.b16 %v449, %v448
    %v459 = vpack.c.b16 %v451, %v450
    %468 = vmatprep.subr.bf16.mxu0 0
    %469 = vmatpush1.bf16.msra.mxu0 %v452
    %470 = vmatprep.subr.bf16.mxu0 0
    %471 = vmatpush1.bf16.msra.mxu0 %v453
    %472 = vmatprep.subr.bf16.mxu0 0
    %473 = vmatpush1.bf16.msra.mxu0 %v454
    %474 = vmatprep.subr.bf16.mxu0 0
    %475 = vmatpush1.bf16.msra.mxu0 %v455
    %476 = vmatprep.subr.bf16.mxu0 0
    %477 = vmatpush1.bf16.msra.mxu0 %v456
    %478 = vmatprep.subr.bf16.mxu0 0
    %479 = vmatpush1.bf16.msra.mxu0 %v457
    %480 = vmatprep.subr.bf16.mxu0 0
    %481 = vmatpush1.bf16.msra.mxu0 %v458
    %482 = vmatprep.subr.bf16.mxu0 0
    %483 = vmatpush1.bf16.msra.mxu0 %v459
    %484 = vmatprep.subr.bf16.mxu0 0
    %485 = vmatpush1.bf16.msra.mxu0 0
    %486 = vmatprep.subr.bf16.mxu0 0
    %487 = vmatpush1.bf16.msra.mxu0 0
    %488 = vmatprep.subr.bf16.mxu0 0
    %489 = vmatpush1.bf16.msra.mxu0 0
    %490 = vmatprep.subr.bf16.mxu0 0
    %491 = vmatpush1.bf16.msra.mxu0 0
    %492 = vmatprep.subr.bf16.mxu0 0
    %493 = vmatpush1.bf16.msra.mxu0 0
    %494 = vmatprep.subr.bf16.mxu0 0
    %495 = vmatpush1.bf16.msra.mxu0 0
    %496 = vmatprep.subr.bf16.mxu0 0
    %497 = vmatpush1.bf16.msra.mxu0 0
    %498 = vmatprep.subr.bf16.mxu0 0
    %499 = vmatpush1.bf16.msra.mxu0 0
    %500 = vmatprep.mubr.bf16.mxu0 0
    %501 = vmatmul.mubr.bf16.gmra.mrb[0].mxu0 %v396
    %v502 = vpop.f32.mrb[0].mxu0
    %v503 = vadd.f32 %v418, %v502
    %v504 = vpop.f32.mrb[0].mxu0
    %v505 = vpop.f32.mrb[0].mxu0
    %v506 = vadd.f32 %v418, %v505
    %v507 = vpop.f32.mrb[0].mxu0
    %508 = vdwg.mxu0
    %v509 = vpack.c.bf16 %v506, %v503
    %v511 = vunpack.c.l.b16 %v509
    %v512 = vunpack.c.h.b16 %v509
    %v513 = vpack.c.b16 %v511, %v511
    %v514 = vpack.c.b16 %v512, %v512
    %517 = vst [vmem:[#allocation10] sm:$0xf] %v513
    %518 = vst [vmem:[#allocation10 + $0x4] sm:$0xf] %v514
    // Predicated region
    $region46: #{tpu_custom_call.1} parent=1 // pred_check
      _
    $region47: #{tpu_custom_call.1} parent=1 // pred_check_branch
      %520 = sbr.rel (0) target = $region49
    $region48: #{tpu_custom_call.1} parent=1 // pred_region
      %s522 = ssub.s32 128, 128
      %523 = vsyncadd [#allocation4], %s522
      %s524 = sshll.u32 [#allocation10], 4
      %s525 = int_to_ptr.vmem [resolvable:$true] %s524
      %530 = dma.vmem_to_hbm [thread:$0]  %s525, 128, %s7, [#allocation4], 64, 64, 4
    $region49: #{tpu_custom_call.1} parent=1 // pred_fallthru
      _
    // Predicated region
    $region50: #{tpu_custom_call.1} parent=1 // pred_check
      _
    $region51: #{tpu_custom_call.1} parent=1 // pred_check_branch
      %532 = sbr.rel (0) target = $region53
    $region52: #{tpu_custom_call.1} parent=1 // pred_region
      %533 = dma.done [#allocation4], 128
    $region53: #{tpu_custom_call.1} parent=1 // pred_fallthru
      _
    %534 = vsyncpa [#allocation3], 1
    %535 = vsyncpa [#allocation6], 1
    %536 = vsyncpa [#allocation9], 1
    %537 = vsyncpa [#allocation4], 1

</llo_original>
